<compile_context>
chip_gen: v5e
topology: v5e:2x2
jax: 0.10.0
libtpu: 0.0.40
codegen_flags: <defaults>
</compile_context>

<pallas_src>
import jax
import jax.numpy as jnp
from jax.experimental import pallas as pl
from jax.experimental.pallas import tpu as pltpu

LANE = 128


def _round_up(n, m):
    return ((n + m - 1) // m) * m


# ----------------------------------------------------------------------------
# Kernel: two MXU matmuls + bias adds + one ReLU, all f32.
# ----------------------------------------------------------------------------
def mlp_kernel(x_ref, w12_ref, b12_ref, w345_ref, b345_ref, o_ref):
    h = jnp.dot(x_ref[...], w12_ref[...], preferred_element_type=jnp.float32)
    h = jnp.maximum(h + b12_ref[...], 0.0)                       # ReLU
    o_ref[...] = (jnp.dot(h, w345_ref[...], preferred_element_type=jnp.float32)
                  + b345_ref[...])


# ----------------------------------------------------------------------------
# One-time parameter preparation (fold linear chains + pad hidden dim only).
# ----------------------------------------------------------------------------
def prepare_params(params):
    """params: list of (W, b), W:(in,out), b:(1,out).  Returns cached dict."""
    (w1, b1), (w2, b2), (w3, b3), (w4, b4), (w5, b5) = params
    # Fold the purely-linear chains around the single ReLU (exact up to FP
    # reassociation).
    w12 = w1 @ w2                       # (d_in, 32)
    b12 = b1 @ w2 + b2                  # (1, 32)
    w345 = w3 @ w4 @ w5                 # (32, out)
    b345 = (b3 @ w4 + b4) @ w5 + b5     # (1, out)

    d_in, hidden = w12.shape
    out_dim = w345.shape[1]
    hid_p = _round_up(hidden, LANE)     # only the VMEM-resident hidden dim is
                                        # lane-padded; zero padding is exact.
    w12_p = jnp.pad(w12, ((0, 0), (0, hid_p - hidden)))          # (d_in, 128)
    b12_p = jnp.pad(b12, ((0, 0), (0, hid_p - hidden)))          # (1, 128)
    w345_p = jnp.pad(w345, ((0, hid_p - hidden), (0, 0)))        # (128, out)

    return dict(w12=w12_p, b12=b12_p, w345=w345_p, b345=b345,
                d_in=d_in, hidden=hidden, hid_p=hid_p, out_dim=out_dim)


def _select_tile(B, tm_large):
    # >=2 programs when the batch allows it (v7x has 2 TCs per chip), tiles up
    # to tm_large rows, always a multiple of 8 (sublane constraint).
    return max(8, min(tm_large, _round_up(pl.cdiv(B, 2), 8)))


def _xla_forward(x, prep):
    h = jnp.maximum(x @ prep["w12"] + prep["b12"], 0.0)
    return h @ prep["w345"] + prep["b345"]


# ----------------------------------------------------------------------------
# Forward wrapper.
# ----------------------------------------------------------------------------
def mlp_forward(x, prep, *, tm_large=1024, min_pallas_batch=32,
                force_pallas=False):
    """x: (B, d_in) float32.  prep: output of prepare_params()."""
    B, d_in = x.shape
    assert d_in == prep["d_in"]
    out_dim = prep["out_dim"]
    hid_p = prep["hid_p"]

    if B < min_pallas_batch and not force_pallas:
        # Tiny batch: custom-call dispatch + DMA setup dominate; let XLA fuse.
        return _xla_forward(x, prep)

    tm = _select_tile(B, tm_large)
    grid = (pl.cdiv(B, tm),)            # ragged last block handled by Pallas

    # True (unpadded) work estimate.
    hidden = prep["hidden"]
    flops = 2 * B * (d_in * hidden + hidden * out_dim)
    bytes_accessed = 4 * (B * d_in + B * out_dim
                          + d_in * hidden + hidden
                          + hidden * out_dim + out_dim)

    return pl.pallas_call(
        mlp_kernel,
        grid=grid,
        in_specs=[
            # x streamed unpadded: last block dim == full array dim (legal).
            pl.BlockSpec((tm, d_in), lambda i: (i, 0)),
            pl.BlockSpec((d_in, hid_p), lambda i: (0, 0)),   # W12 (resident)
            pl.BlockSpec((1, hid_p), lambda i: (0, 0)),      # b12
            pl.BlockSpec((hid_p, out_dim), lambda i: (0, 0)),  # W345 (resident)
            pl.BlockSpec((1, out_dim), lambda i: (0, 0)),    # b345
        ],
        # Output block is the real out_dim (full-array last dim) -> minimal
        # writeback traffic; no padded output buffer to slice.
        out_specs=pl.BlockSpec((tm, out_dim), lambda i: (i, 0)),
        out_shape=jax.ShapeDtypeStruct((B, out_dim), jnp.float32),
        compiler_params=pltpu.CompilerParams(
            dimension_semantics=("parallel",)),
        cost_estimate=pl.CostEstimate(
            flops=flops, transcendentals=0, bytes_accessed=bytes_accessed),
    )(x, prep["w12"], prep["b12"], prep["w345"], prep["b345"])


# ----------------------------------------------------------------------------
# Init + reference (mirrors the PyTorch module exactly).
# ----------------------------------------------------------------------------
def init_params(key, input_dim, output_dim):
    """PyTorch nn.Linear default init: U[-1/sqrt(fan_in), +1/sqrt(fan_in)]."""
    dims = [input_dim, 64, 32, 16, 8, output_dim]
    params = []
    for i in range(len(dims) - 1):
        fan_in, fan_out = dims[i], dims[i + 1]
        key, kw, kb = jax.random.split(key, 3)
        bound = 1.0 / (fan_in ** 0.5)
        w = jax.random.uniform(kw, (fan_in, fan_out), jnp.float32, -bound, bound)
        b = jax.random.uniform(kb, (1, fan_out), jnp.float32, -bound, bound)
        params.append((w, b))
    return params


def reference_forward(x, params):
    h = x @ params[0][0] + params[0][1]
    h = h @ params[1][0] + params[1][1]
    h = jnp.maximum(h, 0.0)
    h = h @ params[2][0] + params[2][1]
    h = h @ params[3][0] + params[3][1]
    h = h @ params[4][0] + params[4][1]
    return h


if __name__ == "__main__":
    # load_diabetes(): 10 features, regression target -> output_dim = 1.
    input_dim, output_dim = 10, 1

    key = jax.random.PRNGKey(0)
    key, kx1, kx2 = jax.random.split(key, 3)

    params = init_params(key, input_dim, output_dim)
    prep = prepare_params(params)          # folded + padded once, reused

    # Tiny batch (force the Pallas path so the kernel is exercised).
    x_small = jax.random.normal(kx1, (8, input_dim), dtype=jnp.float32)
    out_small = jax.block_until_ready(
        mlp_forward(x_small, prep, force_pallas=True))
    ref_small = reference_forward(x_small, params)
    assert out_small.shape == (8, output_dim)
    assert jnp.allclose(out_small, ref_small, atol=1e-4, rtol=1e-4)

    # Larger batch (the diabetes dataset has 442 samples) -> tiled grid with a
    # ragged last block and >=2 parallel programs.
    x_big = jax.random.normal(kx2, (442, input_dim), dtype=jnp.float32)
    out_big = jax.block_until_ready(mlp_forward(x_big, prep))
    ref_big = reference_forward(x_big, params)
    assert out_big.shape == (442, output_dim)
    assert jnp.allclose(out_big, ref_big, atol=1e-4, rtol=1e-4)

    print("KERNEL_OK")
</pallas_src>

<mosaic_0001>
module attributes {stable_mosaic.version = 11 : i64} {
  func.func @mlp_kernel(%arg0: i32, %arg1: memref<8x10xf32, #tpu.memory_space<vmem>>, %arg2: memref<10x128xf32, #tpu.memory_space<vmem>>, %arg3: memref<1x128xf32, #tpu.memory_space<vmem>>, %arg4: memref<128x1xf32, #tpu.memory_space<vmem>>, %arg5: memref<1x1xf32, #tpu.memory_space<vmem>>, %arg6: memref<8x1xf32, #tpu.memory_space<vmem>>) attributes {dimension_semantics = [#tpu.dimension_semantics<parallel>], iteration_bounds = array<i64: 1>, scalar_prefetch = 0 : i64, scratch_operands = 0 : i64, tpu.core_type = #tpu.core_type<tc>, window_params = [{transform_indices = @transform_0, window_bounds = array<i64: 8, 10>}, {pipeline_mode = #tpu.pipeline_mode<synchronous>, transform_indices = @transform_1, window_bounds = array<i64: 10, 128>}, {pipeline_mode = #tpu.pipeline_mode<synchronous>, transform_indices = @transform_2, window_bounds = array<i64: 1, 128>}, {pipeline_mode = #tpu.pipeline_mode<synchronous>, transform_indices = @transform_3, window_bounds = array<i64: 128, 1>}, {pipeline_mode = #tpu.pipeline_mode<synchronous>, transform_indices = @transform_4, window_bounds = array<i64: 1, 1>}, {transform_indices = @transform_5, window_bounds = array<i64: 8, 1>}]} {
    %c0 = arith.constant 0 : index
    %c0_0 = arith.constant 0 : index
    %0 = vector.load %arg1[%c0, %c0_0] : memref<8x10xf32, #tpu.memory_space<vmem>>, vector<8x10xf32>
    %c0_1 = arith.constant 0 : index
    %c0_2 = arith.constant 0 : index
    %1 = vector.load %arg2[%c0_1, %c0_2] : memref<10x128xf32, #tpu.memory_space<vmem>>, vector<10x128xf32>
    %cst = arith.constant dense<0.000000e+00> : vector<8x128xf32>
    %2 = tpu.matmul %0, %1, %cst {dimension_numbers = #tpu.dot_dimension_numbers<[1], [0], [0], [1], [0, 0, 1, 1], [], []>} : vector<8x10xf32>, vector<10x128xf32>, vector<8x128xf32> -> vector<8x128xf32>
    %c0_3 = arith.constant 0 : index
    %c0_4 = arith.constant 0 : index
    %3 = vector.load %arg3[%c0_3, %c0_4] : memref<1x128xf32, #tpu.memory_space<vmem>>, vector<1x128xf32>
    %4 = vector.broadcast %3 : vector<1x128xf32> to vector<8x128xf32>
    %5 = arith.addf %2, %4 : vector<8x128xf32>
    %cst_5 = arith.constant 0.000000e+00 : f32
    %6 = vector.broadcast %cst_5 : f32 to vector<8x128xf32>
    %7 = arith.maximumf %5, %6 : vector<8x128xf32>
    %c0_6 = arith.constant 0 : index
    %c0_7 = arith.constant 0 : index
    %8 = vector.load %arg4[%c0_6, %c0_7] : memref<128x1xf32, #tpu.memory_space<vmem>>, vector<128x1xf32>
    %cst_8 = arith.constant dense<0.000000e+00> : vector<8x1xf32>
    %9 = tpu.matmul %7, %8, %cst_8 {dimension_numbers = #tpu.dot_dimension_numbers<[1], [0], [0], [1], [0, 0, 1, 1], [], []>} : vector<8x128xf32>, vector<128x1xf32>, vector<8x1xf32> -> vector<8x1xf32>
    %c0_9 = arith.constant 0 : index
    %c0_10 = arith.constant 0 : index
    %10 = vector.load %arg5[%c0_9, %c0_10] : memref<1x1xf32, #tpu.memory_space<vmem>>, vector<1x1xf32>
    %11 = vector.broadcast %10 : vector<1x1xf32> to vector<8x1xf32>
    %12 = arith.addf %9, %11 : vector<8x1xf32>
    %c0_11 = arith.constant 0 : index
    %c0_12 = arith.constant 0 : index
    %13 = vector.load %arg6[%c0_11, %c0_12] : memref<8x1xf32, #tpu.memory_space<vmem>>, vector<8x1xf32>
    tpu.vector_store %arg6[%c0_11, %c0_12], %12 {strides = array<i32>} : memref<8x1xf32, #tpu.memory_space<vmem>>, vector<8x1xf32>,
    return
  }
  func.func @transform_0(%arg0: i32) -> (i32, i32) {
    %c0_i32 = arith.constant 0 : i32
    %c0_i32_0 = arith.constant 0 : i32
    return %arg0, %c0_i32 : i32, i32
  }
  func.func @transform_1(%arg0: i32) -> (i32, i32) {
    %c0_i32 = arith.constant 0 : i32
    %c0_i32_0 = arith.constant 0 : i32
    %c0_i32_1 = arith.constant 0 : i32
    return %c0_i32, %c0_i32_0 : i32, i32
  }
  func.func @transform_2(%arg0: i32) -> (i32, i32) {
    %c0_i32 = arith.constant 0 : i32
    %c0_i32_0 = arith.constant 0 : i32
    %c0_i32_1 = arith.constant 0 : i32
    return %c0_i32, %c0_i32_0 : i32, i32
  }
  func.func @transform_3(%arg0: i32) -> (i32, i32) {
    %c0_i32 = arith.constant 0 : i32
    %c0_i32_0 = arith.constant 0 : i32
    %c0_i32_1 = arith.constant 0 : i32
    return %c0_i32, %c0_i32_0 : i32, i32
  }
  func.func @transform_4(%arg0: i32) -> (i32, i32) {
    %c0_i32 = arith.constant 0 : i32
    %c0_i32_0 = arith.constant 0 : i32
    %c0_i32_1 = arith.constant 0 : i32
    return %c0_i32, %c0_i32_0 : i32, i32
  }
  func.func @transform_5(%arg0: i32) -> (i32, i32) {
    %c0_i32 = arith.constant 0 : i32
    %c0_i32_0 = arith.constant 0 : i32
    return %arg0, %c0_i32 : i32, i32
  }
}

</mosaic_0001>

<llo_original>
// kernel: tpu_custom_call.1
$region0: #{tpu_custom_call.1}
  #allocation0 [shape = 'u32[]', space=smem, size = 0x4, offset = 0x4, fixed_abs, tag = 'smem constant byte address 0x4 - core index']
  #allocation1 [shape = 'u32[72,128]{1,0:T(1,128)}', space=vmem, size = 0x9000, scoped, tag = 'internal scratch']
  #allocation2 [shape = 'f32[1,1]{1,0:T(1,128)S(1)}', space=vmem, size = 0x200, scoped, tag = 'scoped memory for tpu_custom_call.1']
  %s0 = inlined_call_operand.vmem [shape: f32[8,10], index: 0, kind: input, shape index: {}]
  %s1 = inlined_call_operand.vmem [shape: f32[10,128], index: 1, kind: input, shape index: {}]
  %s2 = inlined_call_operand.vmem [shape: f32[1,128], index: 2, kind: input, shape index: {}]
  %s3 = inlined_call_operand.vmem [shape: f32[128,1], index: 3, kind: input, shape index: {}]
  %s4 = inlined_call_operand.<no memory space> [shape: f32[1,1], index: 4, kind: input, shape index: {}]
  %s5 = inlined_call_operand.vmem [shape: f32[8,1], index: 5, kind: output, shape index: {}]
  %s6 = sld [smem:[#allocation0]]
  $region30: #{tpu_custom_call.1} parent=0
    _
  %s8 = ssub.s32 1, %s6
  %s9 = scalar_select 0, %s8, %s6
  %v10 = vstv %s4
  %11 = vst [vmem:[#allocation2] sm:$0x1] %v10
  // Predicated region
  $region2: #{tpu_custom_call.1} parent=0 // pred_check
    _
  $region3: #{tpu_custom_call.1} parent=0 // pred_check_branch
    %13 = sbr.rel (0) target = $region5
  $region4: #{tpu_custom_call.1} parent=0 // pred_region
    _
  $region5: #{tpu_custom_call.1} parent=0 // pred_fallthru
    _
  // Predicated region
  $region6: #{tpu_custom_call.1} parent=0 // pred_check
    _
  $region7: #{tpu_custom_call.1} parent=0 // pred_check_branch
    %15 = sbr.rel (0) target = $region9
  $region8: #{tpu_custom_call.1} parent=0 // pred_region
    _
  $region9: #{tpu_custom_call.1} parent=0 // pred_fallthru
    _
  // Predicated region
  $region10: #{tpu_custom_call.1} parent=0 // pred_check
    _
  $region11: #{tpu_custom_call.1} parent=0 // pred_check_branch
    %17 = sbr.rel (0) target = $region13
  $region12: #{tpu_custom_call.1} parent=0 // pred_region
    _
  $region13: #{tpu_custom_call.1} parent=0 // pred_fallthru
    _
  // Predicated region
  $region14: #{tpu_custom_call.1} parent=0 // pred_check
    _
  $region15: #{tpu_custom_call.1} parent=0 // pred_check_branch
    %19 = sbr.rel (0) target = $region17
  $region16: #{tpu_custom_call.1} parent=0 // pred_region
    _
  $region17: #{tpu_custom_call.1} parent=0 // pred_fallthru
    _
  // Predicated region
  $region18: #{tpu_custom_call.1} parent=0 // pred_check
    _
  $region19: #{tpu_custom_call.1} parent=0 // pred_check_branch
    %21 = sbr.rel (0) target = $region21
  $region20: #{tpu_custom_call.1} parent=0 // pred_region
    _
  $region21: #{tpu_custom_call.1} parent=0 // pred_fallthru
    _
  %v22 = vld [vmem:[%s0] sm:$0xff]
  %v23 = vld [vmem:[%s1] sm:$0xff]
  %v24 = vld [vmem:[%s1 + $0x8] sm:$0x3]
  %v25 = vld [vmem:[%s2] sm:$0x1]
  %v27 = vperm.slane %v25, 0
  %vm29 = vcmask 80896
  %v31 = vsel %vm29, %v22, 0
  %vm33 = vcmask 1041408
  %v35 = vsel %vm33, %v24, 0
  %37 = vmatpush.msra.mxu0 0.0
  %38 = vmatpush.msra.mxu0 0.0
  %39 = vmatpush.msra.mxu0 0.0
  %40 = vmatpush.msra.mxu0 0.0
  %41 = vmatpush.msra.mxu0 0.0
  %42 = vmatpush.msra.mxu0 0.0
  %43 = vmatpush.msra.mxu0 0.0
  %44 = vmatpush.msra.mxu0 0.0
  %45 = vmatpush.msra.mxu0 0.0
  %46 = vmatpush.msra.mxu0 0.0
  %47 = vmatpush.msra.mxu0 0.0
  %48 = vmatpush.msra.mxu0 0.0
  %49 = vmatpush.msra.mxu0 0.0
  %50 = vmatpush.msra.mxu0 0.0
  %51 = vmatpush.msra.mxu0 %v35
  %52 = vmatpush.msra.mxu0 %v23
  %53 = vmatmul.f32.gmra.mxu0 %v31
  %v54 = vpop.f32.mrf.mxu0
  %v55 = vadd.f32 %v27, %v54
  %56 = vdwg.mxu0
  %v57 = vmax.f32 %v55, 0.0
  %v58 = vld [vmem:[%s3] sm:$0xff]
  %v59 = vld [vmem:[%s3 + $0x8] sm:$0xff]
  %v60 = vld [vmem:[%s3 + $0x10] sm:$0xff]
  %v61 = vld [vmem:[%s3 + $0x18] sm:$0xff]
  %v62 = vld [vmem:[%s3 + $0x20] sm:$0xff]
  %v63 = vld [vmem:[%s3 + $0x28] sm:$0xff]
  %v64 = vld [vmem:[%s3 + $0x30] sm:$0xff]
  %v65 = vld [vmem:[%s3 + $0x38] sm:$0xff]
  %v66 = vld [vmem:[%s3 + $0x40] sm:$0xff]
  %v67 = vld [vmem:[%s3 + $0x48] sm:$0xff]
  %v68 = vld [vmem:[%s3 + $0x50] sm:$0xff]
  %v69 = vld [vmem:[%s3 + $0x58] sm:$0xff]
  %v70 = vld [vmem:[%s3 + $0x60] sm:$0xff]
  %v71 = vld [vmem:[%s3 + $0x68] sm:$0xff]
  %v72 = vld [vmem:[%s3 + $0x70] sm:$0xff]
  %v73 = vld [vmem:[%s3 + $0x78] sm:$0xff]
  %v74 = vld [vmem:[#allocation2] sm:$0x1]
  %v76 = vperm.slane %v74, 0
  %78 = vmatpush.msra.mxu0 %v73
  %79 = vmatpush.msra.mxu0 %v72
  %80 = vmatpush.msra.mxu0 %v71
  %81 = vmatpush.msra.mxu0 %v70
  %82 = vmatpush.msra.mxu0 %v69
  %83 = vmatpush.msra.mxu0 %v68
  %84 = vmatpush.msra.mxu0 %v67
  %85 = vmatpush.msra.mxu0 %v66
  %86 = vmatpush.msra.mxu0 %v65
  %87 = vmatpush.msra.mxu0 %v64
  %88 = vmatpush.msra.mxu0 %v63
  %89 = vmatpush.msra.mxu0 %v62
  %90 = vmatpush.msra.mxu0 %v61
  %91 = vmatpush.msra.mxu0 %v60
  %92 = vmatpush.msra.mxu0 %v59
  %93 = vmatpush.msra.mxu0 %v58
  %94 = vmatmul.f32.gmra.mxu0 %v57
  %v95 = vpop.f32.mrf.mxu0
  %v96 = vadd.f32 %v76, %v95
  %97 = vdwg.mxu0
  %vm98 = vcmask 7168
  %99 = vst.msk [vmem:[%s5] sm:$0xff] %vm98, %v96
  // Predicated region
  $region22: #{tpu_custom_call.1} parent=0 // pred_check
    _
  $region23: #{tpu_custom_call.1} parent=0 // pred_check_branch
    %101 = sbr.rel (0) target = $region25
  $region24: #{tpu_custom_call.1} parent=0 // pred_region
    _
  $region25: #{tpu_custom_call.1} parent=0 // pred_fallthru
    _
  // Predicated region
  $region26: #{tpu_custom_call.1} parent=0 // pred_check
    _
  $region27: #{tpu_custom_call.1} parent=0 // pred_check_branch
    %103 = sbr.rel (0) target = $region29
  $region28: #{tpu_custom_call.1} parent=0 // pred_region
    _
  $region29: #{tpu_custom_call.1} parent=0 // pred_fallthru
    _

</llo_original>
